<compile_context>
chip_gen: v7x
topology: tpu7x:2x2x1
jax: 0.10.0
libtpu: 0.0.40
codegen_flags: <defaults>
</compile_context>

<pallas_src>
import math

import jax
import jax.numpy as jnp
from jax.experimental import pallas as pl
from jax.experimental.pallas import tpu as pltpu


_INV_SQRT2 = 1.0 / math.sqrt(2.0)


def _gelu_kernel(x_ref, o_ref):
    x = x_ref[...].astype(jnp.float32)
    # exact gelu: x * 0.5 * (1 + erf(x / sqrt(2)))
    y = x * 0.5 * (1.0 + jax.lax.erf(x * _INV_SQRT2))
    o_ref[...] = y.astype(o_ref.dtype)


def _vmem_budget_bytes():
    """Scoped-VMEM limit to request and per-tile byte target for this TPU gen."""
    cap = 64 * 1024 * 1024  # conservative fallback (v7x-sized physical VMEM)
    try:
        cap = int(getattr(pltpu.get_tpu_info(), "vmem_capacity_bytes", cap))
    except Exception:
        pass
    # Scoped limit we ask the compiler for: well under physical VMEM.
    # (v5e/v6e: 96 MiB of 128 MiB; v7x: 48 MiB of 64 MiB.)
    vmem_limit = min((cap * 3) // 4, 96 * 1024 * 1024)
    # BlockSpec double-buffers input and output: 4 x tile_bytes must fit with slack.
    tile_bytes = min(8 * 1024 * 1024, vmem_limit // 6)
    return vmem_limit, tile_bytes


def gelu_pallas(x, *, lane_cols=512):
    """Elementwise exact GeLU via a Pallas TPU kernel.

    Works for any input shape; internally flattened to a lane-dense
    (rows, lane_cols) slab with lane_cols a multiple of 128.
    """
    assert lane_cols % 128 == 0
    orig_shape = x.shape
    total = x.size
    if total == 0:
        return x

    itemsize = jnp.dtype(x.dtype).itemsize
    # Sublane alignment for packed dtypes: 8 (f32) / 16 (bf16) / 32 (int8).
    sublane = 8 * max(1, 4 // itemsize)

    vmem_limit, tile_bytes = _vmem_budget_bytes()

    # --- flatten -> pad -> lane-dense 2D slab --------------------------------
    flat = x.reshape(-1)
    chunk = lane_cols * sublane
    pad = (-total) % chunk
    if pad:
        flat = jnp.pad(flat, (0, pad))  # gelu(0) == 0, padded tail is harmless
    rows = flat.shape[0] // lane_cols
    x2d = flat.reshape(rows, lane_cols)

    # --- per-generation block size -------------------------------------------
    target_rows = (tile_bytes // (lane_cols * itemsize)) // sublane * sublane
    target_rows = max(sublane, target_rows)
    block_rows = min(target_rows, rows)
    # Keep >=2 grid steps when the input allows it (megacore sharding on v7x).
    if rows >= 2 * sublane and block_rows >= rows:
        block_rows = max(sublane, (rows // 2) // sublane * sublane)
    block_rows = max(sublane, (block_rows // sublane) * sublane)

    grid = (pl.cdiv(rows, block_rows),)

    out2d = pl.pallas_call(
        _gelu_kernel,
        out_shape=jax.ShapeDtypeStruct((rows, lane_cols), x.dtype),
        grid_spec=pltpu.PrefetchScalarGridSpec(
            num_scalar_prefetch=0,
            grid=grid,
            in_specs=[pl.BlockSpec((block_rows, lane_cols), lambda i: (i, 0))],
            out_specs=pl.BlockSpec((block_rows, lane_cols), lambda i: (i, 0)),
        ),
        compiler_params=pltpu.CompilerParams(
            dimension_semantics=("parallel",),
            vmem_limit_bytes=vmem_limit,
        ),
    )(x2d)

    out_flat = out2d.reshape(-1)
    if pad:
        out_flat = out_flat[:total]
    return out_flat.reshape(orig_shape)


def gelu_ref(x):
    xf = x.astype(jnp.float32)
    return (xf * 0.5 * (1.0 + jax.lax.erf(xf * _INV_SQRT2))).astype(x.dtype)


if __name__ == "__main__":
    key = jax.random.PRNGKey(0)

    # Small shape consistent with the forward pass (elementwise on hidden states):
    # (batch=2, seq=8, hidden=32)
    x = jax.random.normal(key, (2, 8, 32), dtype=jnp.float32)
    y = gelu_pallas(x)
    jax.block_until_ready(y)
    y_ref = gelu_ref(x)
    assert y.shape == x.shape and y.dtype == x.dtype
    assert jnp.allclose(y, y_ref, atol=1e-5, rtol=1e-5)

    # Slightly larger bf16 case to exercise the multi-step, lane-dense path
    # (network dtype stays bf16 end-to-end; f32 math only inside the kernel).
    xb = jax.random.normal(key, (4, 128, 768), dtype=jnp.bfloat16)
    yb = gelu_pallas(xb)
    jax.block_until_ready(yb)
    yb_ref = gelu_ref(xb)
    assert yb.shape == xb.shape and yb.dtype == xb.dtype
    assert jnp.allclose(yb.astype(jnp.float32), yb_ref.astype(jnp.float32),
                        atol=2e-2, rtol=2e-2)

    print("KERNEL_OK")
</pallas_src>

<mosaic_0001>
module attributes {stable_mosaic.version = 11 : i64} {
  func.func @_gelu_kernel(%arg0: i32, %arg1: memref<8x512xf32, #tpu.memory_space<vmem>>, %arg2: memref<8x512xf32, #tpu.memory_space<vmem>>) attributes {dimension_semantics = [#tpu.dimension_semantics<parallel>], iteration_bounds = array<i64: 1>, scalar_prefetch = 0 : i64, scratch_operands = 0 : i64, tpu.core_type = #tpu.core_type<tc>, window_params = [{transform_indices = @transform_0, window_bounds = array<i64: 8, 512>}, {transform_indices = @transform_1, window_bounds = array<i64: 8, 512>}]} {
    %c0 = arith.constant 0 : index
    %c0_0 = arith.constant 0 : index
    %0 = vector.load %arg1[%c0, %c0_0] : memref<8x512xf32, #tpu.memory_space<vmem>>, vector<8x512xf32>
    %cst = arith.constant 5.000000e-01 : f32
    %1 = vector.broadcast %cst : f32 to vector<8x512xf32>
    %2 = arith.mulf %0, %1 : vector<8x512xf32>
    %cst_1 = arith.constant 0.707106769 : f32
    %3 = vector.broadcast %cst_1 : f32 to vector<8x512xf32>
    %4 = arith.mulf %0, %3 : vector<8x512xf32>
    %5 = math.erf %4 : vector<8x512xf32>
    %cst_2 = arith.constant 1.000000e+00 : f32
    %6 = vector.broadcast %cst_2 : f32 to vector<8x512xf32>
    %7 = arith.addf %6, %5 : vector<8x512xf32>
    %8 = arith.mulf %2, %7 : vector<8x512xf32>
    %c0_3 = arith.constant 0 : index
    %c0_4 = arith.constant 0 : index
    %9 = vector.load %arg2[%c0_3, %c0_4] : memref<8x512xf32, #tpu.memory_space<vmem>>, vector<8x512xf32>
    tpu.vector_store %arg2[%c0_3, %c0_4], %8 {strides = array<i32>} : memref<8x512xf32, #tpu.memory_space<vmem>>, vector<8x512xf32>,
    return
  }
  func.func @transform_0(%arg0: i32) -> (i32, i32) {
    %c0_i32 = arith.constant 0 : i32
    %c0_i32_0 = arith.constant 0 : i32
    return %arg0, %c0_i32 : i32, i32
  }
  func.func @transform_1(%arg0: i32) -> (i32, i32) {
    %c0_i32 = arith.constant 0 : i32
    %c0_i32_0 = arith.constant 0 : i32
    return %arg0, %c0_i32 : i32, i32
  }
}

</mosaic_0001>

<llo_original>
// kernel: tpu_custom_call.1
$region0: #{tpu_custom_call.1}
  #allocation0 [shape = 'u32[]', space=smem, size = 0x4, offset = 0x4, fixed_abs, tag = 'smem constant byte address 0x4 - core index']
  #allocation1 [shape = 'u32[144,128]{1,0:T(1,128)}', space=vmem, size = 0x12000, scoped, tag = 'internal scratch']
  %s0 = inlined_call_operand.hbm [shape: f32[8,512], index: 0, kind: input, shape index: {}]
  %s1 = inlined_call_operand.hbm [shape: f32[8,512], index: 1, kind: output, shape index: {}]
  %s2 = sld [smem:[#allocation0]]
  $region18: #{tpu_custom_call.1} parent=0
    _
  %s4 = ssub.s32 1, %s2
  %s5 = scalar_select 0, %s4, %s2
  $region1: #{tpu_custom_call.1} parent=0
    #allocation2 [shape = 'u8[16384]{0}', space=vmem, size = 0x4000, scoped, tag = 'input window, operand 0, single buffered']
    #allocation3 [shape = 's32[1]{0}', space=sflag, size = 0x4, scoped, tag = 'scoped memory for tpu_custom_call.1']
    #allocation4 [shape = 's32[1]{0}', space=sflag, size = 0x4, scoped, tag = 'scoped memory for tpu_custom_call.1']
    #allocation5 [shape = 'u8[16384]{0}', space=vmem, size = 0x4000, scoped, tag = 'output window, operand 0, single buffered']
    %6 = vsyncpa [#allocation3], 0
    %7 = vsyncpa [#allocation4], 0
    // Predicated region
    $region2: #{tpu_custom_call.1} parent=1 // pred_check
      _
    $region3: #{tpu_custom_call.1} parent=1 // pred_check_branch
      %9 = sbr.rel (0) target = $region5
    $region4: #{tpu_custom_call.1} parent=1 // pred_region
      %s11 = ssub.s32 512, 512
      %12 = vsyncadd [#allocation3], %s11
      %s14 = sshll.u32 [#allocation2], 4
      %s15 = int_to_ptr.vmem [resolvable:$true] %s14
      %17 = dma.hbm_to_vmem [thread:$0]  %s0, 512, %s15, [#allocation3]
    $region5: #{tpu_custom_call.1} parent=1 // pred_fallthru
      _
    // Predicated region
    $region6: #{tpu_custom_call.1} parent=1 // pred_check
      _
    $region7: #{tpu_custom_call.1} parent=1 // pred_check_branch
      %19 = sbr.rel (0) target = $region9
    $region8: #{tpu_custom_call.1} parent=1 // pred_region
      %20 = dma.done [#allocation3], 512
    $region9: #{tpu_custom_call.1} parent=1 // pred_fallthru
      _
    %v21 = vld [vmem:[#allocation2] sm:$0xff]
    %v22 = vld [vmem:[#allocation2 + $0x8] sm:$0xff]
    %v23 = vld [vmem:[#allocation2 + $0x10] sm:$0xff]
    %v24 = vld [vmem:[#allocation2 + $0x18] sm:$0xff]
    %v25 = vmul.f32 %v21, 0.5
    %v26 = vmul.f32 %v22, 0.5
    %v27 = vmul.f32 %v23, 0.5
    %v28 = vmul.f32 %v24, 0.5
    %v29 = vmul.f32 %v21, 0.70710677
    %v30 = vmul.f32 %v22, 0.70710677
    %v31 = vmul.f32 %v23, 0.70710677
    %v32 = vmul.f32 %v24, 0.70710677
    %v33 = verf.f32.pop %v29
    %v34 = verf.f32.pop %v30
    %v35 = verf.f32.pop %v31
    %v36 = verf.f32.pop %v32
    %v37 = vadd.f32 %v33, 1.0
    %v38 = vadd.f32 %v34, 1.0
    %v39 = vadd.f32 %v35, 1.0
    %v40 = vadd.f32 %v36, 1.0
    %v41 = vmul.f32 %v25, %v37
    %v42 = vmul.f32 %v26, %v38
    %v43 = vmul.f32 %v27, %v39
    %v44 = vmul.f32 %v28, %v40
    %45 = vst [vmem:[#allocation5] sm:$0xff] %v41
    %46 = vst [vmem:[#allocation5 + $0x8] sm:$0xff] %v42
    %47 = vst [vmem:[#allocation5 + $0x10] sm:$0xff] %v43
    %48 = vst [vmem:[#allocation5 + $0x18] sm:$0xff] %v44
    // Predicated region
    $region10: #{tpu_custom_call.1} parent=1 // pred_check
      _
    $region11: #{tpu_custom_call.1} parent=1 // pred_check_branch
      %50 = sbr.rel (0) target = $region13
    $region12: #{tpu_custom_call.1} parent=1 // pred_region
      %s52 = ssub.s32 512, 512
      %53 = vsyncadd [#allocation4], %s52
      %s55 = sshll.u32 [#allocation5], 4
      %s56 = int_to_ptr.vmem [resolvable:$true] %s55
      %58 = dma.vmem_to_hbm [thread:$0]  %s56, 512, %s1, [#allocation4]
    $region13: #{tpu_custom_call.1} parent=1 // pred_fallthru
      _
    // Predicated region
    $region14: #{tpu_custom_call.1} parent=1 // pred_check
      _
    $region15: #{tpu_custom_call.1} parent=1 // pred_check_branch
      %60 = sbr.rel (0) target = $region17
    $region16: #{tpu_custom_call.1} parent=1 // pred_region
      %61 = dma.done [#allocation4], 512
    $region17: #{tpu_custom_call.1} parent=1 // pred_fallthru
      _
    %62 = vsyncpa [#allocation3], 1
    %63 = vsyncpa [#allocation4], 1

</llo_original>
